<compile_context>
chip_gen: v5e
topology: v5e:2x2
jax: 0.10.0
libtpu: 0.0.40
codegen_flags: <defaults>
</compile_context>

<pallas_src>
import math

import jax
import jax.numpy as jnp
import numpy as np
from jax.experimental import pallas as pl
from jax.experimental.pallas import tpu as pltpu


# ----------------------------- tiled linear (x @ w.T) ------------------------
def _linear_kernel(x_ref, w_ref, o_ref, acc_ref):
    @pl.when(pl.program_id(2) == 0)
    def _():
        acc_ref[...] = jnp.zeros_like(acc_ref)

    # x: (tm, tk), w: (tn, tk)  -> contract on dim 1 of both (no transpose).
    acc_ref[...] += jax.lax.dot_general(
        x_ref[...],
        w_ref[...],
        dimension_numbers=(((1,), (1,)), ((), ())),
        preferred_element_type=jnp.float32,
    )

    @pl.when(pl.program_id(2) == pl.num_programs(2) - 1)
    def _():
        o_ref[...] = acc_ref[...].astype(o_ref.dtype)


def _tile_dim(n, cap, align):
    """Largest tile <= cap that divides n and respects the TPU tiling alignment."""
    if n <= cap:
        return n
    t = (cap // align) * align
    while t >= align:
        if n % t == 0:
            return t
        t -= align
    return n  # fall back to untiled on this axis


def linear(x2d, w):
    """x2d: (M, K), w: (N, K) (PyTorch layout)  ->  (M, N) = x2d @ w.T"""
    M, K = x2d.shape
    N, K2 = w.shape
    assert K == K2
    tm = _tile_dim(M, 512, 8)
    tn = _tile_dim(N, 512, 128)
    tk = _tile_dim(K, 512, 128)
    return pl.pallas_call(
        _linear_kernel,
        out_shape=jax.ShapeDtypeStruct((M, N), x2d.dtype),
        grid=(M // tm, N // tn, K // tk),
        in_specs=[
            pl.BlockSpec((tm, tk), lambda i, j, k: (i, k)),
            pl.BlockSpec((tn, tk), lambda i, j, k: (j, k)),
        ],
        out_specs=pl.BlockSpec((tm, tn), lambda i, j, k: (i, j)),
        scratch_shapes=[pltpu.VMEM((tm, tn), jnp.float32)],
        compiler_params=pltpu.CompilerParams(
            dimension_semantics=("parallel", "parallel", "arbitrary"),
        ),
    )(x2d, w)


# --------------------------- fused flash attention ---------------------------
def _flash_attn_kernel(rope_q_ref, rope_k_ref, q_ref, k_ref, v_ref, o_ref,
                       m_scr, l_scr, acc_scr):
    T, H, D = q_ref.shape          # q tile:  (tq, n_heads, head_dim)
    Tk, Hkv, _ = k_ref.shape       # kv tile: (tk, n_kv_heads, head_dim)
    n_rep = H // Hkv
    Dh = D // 2
    scale = 1.0 / math.sqrt(D)

    iq = pl.program_id(1)
    ik = pl.program_id(2)

    @pl.when(ik == 0)
    def _():
        m_scr[...] = jnp.full_like(m_scr, -jnp.inf)
        l_scr[...] = jnp.zeros_like(l_scr)
        acc_scr[...] = jnp.zeros_like(acc_scr)

    def process(apply_mask):
        # rope tables are packed [cos | sin] with width head_dim (lane-dense).
        # Folding the 1/sqrt(head_dim) scale into q's table scales the scores.
        rq = rope_q_ref[...] * scale
        cos_q, sin_q = rq[:, :Dh], rq[:, Dh:]
        rk = rope_k_ref[...]
        cos_k, sin_k = rk[:, :Dh], rk[:, Dh:]

        if apply_mask:
            row = iq * T + jax.lax.broadcasted_iota(jnp.int32, (T, Tk), 0)
            col = ik * Tk + jax.lax.broadcasted_iota(jnp.int32, (T, Tk), 1)
            causal = col > row

        # Rotate each kv head once (shared by its n_rep query heads).
        k_rot, v_grp = [], []
        for g in range(Hkv):
            kg = k_ref[:, g, :]                         # (Tk, D)
            k_re, k_im = kg[:, :Dh], kg[:, Dh:]
            k_rot.append(
                jnp.concatenate(
                    [k_re * cos_k - k_im * sin_k, k_re * sin_k + k_im * cos_k],
                    axis=1,
                ).astype(k_ref.dtype)
            )
            v_grp.append(v_ref[:, g, :])                # (Tk, D)

        for h in range(H):
            g = h // n_rep                              # GQA group (static)
            qh = q_ref[:, h, :]                         # (T, D)
            q_re, q_im = qh[:, :Dh], qh[:, Dh:]
            qh_rot = jnp.concatenate(
                [q_re * cos_q - q_im * sin_q, q_re * sin_q + q_im * cos_q],
                axis=1,
            ).astype(q_ref.dtype)

            # single full-D contraction, no transpose (scores already scaled)
            s = jax.lax.dot_general(
                qh_rot,
                k_rot[g],
                dimension_numbers=(((1,), (1,)), ((), ())),
                preferred_element_type=jnp.float32,
            )                                           # (T, Tk) f32
            if apply_mask:
                s = jnp.where(causal, -1e30, s)

            m_prev = m_scr[h]                           # (T, 1)
            m_new = jnp.maximum(m_prev, jnp.max(s, axis=-1, keepdims=True))
            alpha = jnp.exp(m_prev - m_new)
            p = jnp.exp(s - m_new)                      # (T, Tk) f32
            l_scr[h] = alpha * l_scr[h] + jnp.sum(p, axis=-1, keepdims=True)
            pv = jax.lax.dot_general(
                p.astype(v_ref.dtype),
                v_grp[g],
                dimension_numbers=(((1,), (0,)), ((), ())),
                preferred_element_type=jnp.float32,
            )                                           # (T, D)
            acc_scr[h] = alpha * acc_scr[h] + pv
            m_scr[h] = m_new

    # Off-diagonal visible kv tiles: no mask. Diagonal tile: causal mask.
    # Tiles with ik > iq are fully masked and skipped entirely.
    @pl.when(ik < iq)
    def _():
        process(False)

    @pl.when(ik == iq)
    def _():
        process(True)

    @pl.when(ik == pl.num_programs(2) - 1)
    def _():
        for h in range(H):
            inv_l = pl.reciprocal(l_scr[h], approx=True)            # (T, 1)
            o_ref[:, h * D:(h + 1) * D] = (acc_scr[h] * inv_l).astype(o_ref.dtype)


# --------------------------- setup-time weight fold ---------------------------
def _deinterleave_perm(n_heads, head_dim):
    """Row permutation so the projection directly emits (even|odd) RoPE layout."""
    d = np.arange(head_dim)
    per_head = np.concatenate([d[0::2], d[1::2]])
    perm = (np.arange(n_heads)[:, None] * head_dim + per_head[None, :]).reshape(-1)
    return jnp.asarray(perm, dtype=jnp.int32)


# ------------------------------- forward pass ---------------------------------
def attention_forward(x, wq, wk, wv, wo, n_heads, n_kv_heads, theta=10000.0,
                      seq_tile=None):
    B, S, dim = x.shape
    D = dim // n_heads
    Dh = D // 2
    Hkv = n_kv_heads

    # Fold RoPE de-interleave permutation into Q/K weight rows (free at setup).
    wq_eff = wq[_deinterleave_perm(n_heads, D)]
    wk_eff = wk[_deinterleave_perm(n_kv_heads, D)]

    # Projections (tiled Pallas matmuls); activations stay in (B, S, H, D).
    x2d = x.reshape(B * S, dim)
    q = linear(x2d, wq_eff).reshape(B, S, n_heads, D)
    k = linear(x2d, wk_eff).reshape(B, S, Hkv, D)
    v = linear(x2d, wv).reshape(B, S, Hkv, D)

    # precompute_freqs_cis (training path: seq_len == max_seq_len), packed [cos|sin]
    inv = 1.0 / (theta ** (jnp.arange(0, D, 2)[:Dh].astype(jnp.float32) / D))
    freqs = jnp.outer(jnp.arange(S, dtype=jnp.float32), inv)            # (S, Dh)
    rope = jnp.concatenate([jnp.cos(freqs), jnp.sin(freqs)], axis=-1)   # (S, D)

    T = seq_tile if seq_tile is not None else _tile_dim(S, 256, 8)
    assert S % T == 0
    n_q = n_kv = S // T

    attn = pl.pallas_call(
        _flash_attn_kernel,
        out_shape=jax.ShapeDtypeStruct((B, S, n_heads * D), x.dtype),
        grid=(B, n_q, n_kv),
        in_specs=[
            # rope rows for the q tile / the kv tile (same array, two views)
            pl.BlockSpec((T, D), lambda b, iq, ik: (iq, 0)),
            pl.BlockSpec((T, D), lambda b, iq, ik: (jnp.minimum(ik, iq), 0)),
            pl.BlockSpec((None, T, n_heads, D), lambda b, iq, ik: (b, iq, 0, 0)),
            # kv block index clamped so fully-masked (skipped) tiles cost no DMA
            pl.BlockSpec((None, T, Hkv, D),
                         lambda b, iq, ik: (b, jnp.minimum(ik, iq), 0, 0)),
            pl.BlockSpec((None, T, Hkv, D),
                         lambda b, iq, ik: (b, jnp.minimum(ik, iq), 0, 0)),
        ],
        # lane-dense output slab, directly consumable by the wo projection
        out_specs=pl.BlockSpec((None, T, n_heads * D), lambda b, iq, ik: (b, iq, 0)),
        scratch_shapes=[
            pltpu.VMEM((n_heads, T, 1), jnp.float32),   # running max  m
            pltpu.VMEM((n_heads, T, 1), jnp.float32),   # running sum  l
            pltpu.VMEM((n_heads, T, D), jnp.float32),   # accumulator
        ],
        compiler_params=pltpu.CompilerParams(
            dimension_semantics=("parallel", "parallel", "arbitrary"),
            vmem_limit_bytes=48 * 1024 * 1024,
        ),
    )(rope, rope, q, k, v)

    out = linear(attn.reshape(B * S, n_heads * D), wo).reshape(B, S, dim)
    return out


# ------------------------------- pure-JAX reference ---------------------------
def reference(x, wq, wk, wv, wo, n_heads, n_kv_heads, theta=10000.0):
    hp = jax.lax.Precision.HIGHEST
    B, S, dim = x.shape
    hd = dim // n_heads
    n_rep = n_heads // n_kv_heads
    Dh = hd // 2

    xq = jnp.einsum("bsi,oi->bso", x, wq, precision=hp).reshape(B, S, n_heads, hd)
    xk = jnp.einsum("bsi,oi->bso", x, wk, precision=hp).reshape(B, S, n_kv_heads, hd)
    xv = jnp.einsum("bsi,oi->bso", x, wv, precision=hp).reshape(B, S, n_kv_heads, hd)

    inv = 1.0 / (theta ** (jnp.arange(0, hd, 2)[:Dh].astype(jnp.float32) / hd))
    freqs = jnp.outer(jnp.arange(S, dtype=jnp.float32), inv)
    fc = jnp.exp(1j * freqs.astype(jnp.complex64))  # (S, Dh)

    def rope(t, H):
        tc = t.reshape(B, S, H, Dh, 2)
        tc = tc[..., 0] + 1j * tc[..., 1]
        tc = tc * fc[None, :, None, :]
        return jnp.stack([jnp.real(tc), jnp.imag(tc)], axis=-1).reshape(B, S, H, hd)

    xq = rope(xq, n_heads)
    xk = rope(xk, n_kv_heads)

    keys = jnp.repeat(xk, n_rep, axis=2)
    vals = jnp.repeat(xv, n_rep, axis=2)

    q = xq.transpose(0, 2, 1, 3)
    k = keys.transpose(0, 2, 1, 3)
    v = vals.transpose(0, 2, 1, 3)

    scores = jnp.einsum("bhqd,bhkd->bhqk", q, k, precision=hp) / math.sqrt(hd)
    mask = jnp.triu(jnp.full((S, S), -jnp.inf, dtype=jnp.float32), k=1)
    scores = scores + mask
    p = jax.nn.softmax(scores, axis=-1)
    o = jnp.einsum("bhqk,bhkd->bhqd", p, v, precision=hp)
    o = o.transpose(0, 2, 1, 3).reshape(B, S, n_heads * hd)
    return jnp.einsum("bsi,oi->bso", o, wo, precision=hp)


# ------------------------------------ main -------------------------------------
if __name__ == "__main__":
    # Small ModelArgs-consistent shapes: dim=32, n_heads=4, n_kv_heads=2 -> head_dim=8.
    # seq=32 with seq_tile=8 exercises the flash pipeline (diagonal, visible and
    # skipped causal tiles; 4x4 q/kv tile grid) while staying small.
    B, S, dim, n_heads, n_kv_heads = 2, 32, 32, 4, 2
    head_dim = dim // n_heads

    key = jax.random.PRNGKey(0)
    kx, kq, kk, kv, ko = jax.random.split(key, 5)
    x = jax.random.normal(kx, (B, S, dim), dtype=jnp.float32)

    bound = 1.0 / math.sqrt(dim)  # nn.Linear default init range
    wq = jax.random.uniform(kq, (n_heads * head_dim, dim), jnp.float32, -bound, bound)
    wk = jax.random.uniform(kk, (n_kv_heads * head_dim, dim), jnp.float32, -bound, bound)
    wv = jax.random.uniform(kv, (n_kv_heads * head_dim, dim), jnp.float32, -bound, bound)
    wo = jax.random.uniform(ko, (n_heads * head_dim, dim), jnp.float32, -bound, bound)

    out = attention_forward(x, wq, wk, wv, wo, n_heads, n_kv_heads, seq_tile=8)
    out = jax.block_until_ready(out)

    ref = reference(x, wq, wk, wv, wo, n_heads, n_kv_heads)
    assert out.shape == (B, S, dim)
    np.testing.assert_allclose(np.asarray(out), np.asarray(ref), rtol=2e-3, atol=2e-3)

    print("KERNEL_OK")
</pallas_src>

<mosaic_0001>
module attributes {stable_mosaic.version = 11 : i64} {
  func.func @_linear_kernel(%arg0: i32, %arg1: i32, %arg2: i32, %arg3: memref<64x32xf32, #tpu.memory_space<vmem>>, %arg4: memref<32x32xf32, #tpu.memory_space<vmem>>, %arg5: memref<64x32xf32, #tpu.memory_space<vmem>>, %arg6: memref<64x32xf32, #tpu.memory_space<vmem>>) attributes {dimension_semantics = [#tpu.dimension_semantics<parallel>, #tpu.dimension_semantics<parallel>, #tpu.dimension_semantics<arbitrary>], iteration_bounds = array<i64: 1, 1, 1>, scalar_prefetch = 0 : i64, scratch_operands = 1 : i64, tpu.core_type = #tpu.core_type<tc>, window_params = [{transform_indices = @transform_0, window_bounds = array<i64: 64, 32>}, {transform_indices = @transform_1, window_bounds = array<i64: 32, 32>}, {transform_indices = @transform_2, window_bounds = array<i64: 64, 32>}]} {
    %c0_i32 = arith.constant 0 : i32
    %0 = arith.cmpi eq, %arg2, %c0_i32 : i32
    %1 = arith.extui %0 : i1 to i32
    %c0_i32_0 = arith.constant 0 : i32
    %2 = arith.cmpi ne, %1, %c0_i32_0 : i32
    scf.if %2 {
      %cst_10 = arith.constant 0.000000e+00 : f32
      %12 = vector.broadcast %cst_10 : f32 to vector<64x32xf32>
      %c0_11 = arith.constant 0 : index
      %c0_12 = arith.constant 0 : index
      %13 = vector.load %arg6[%c0_11, %c0_12] : memref<64x32xf32, #tpu.memory_space<vmem>>, vector<64x32xf32>
      tpu.vector_store %arg6[%c0_11, %c0_12], %12 {strides = array<i32>} : memref<64x32xf32, #tpu.memory_space<vmem>>, vector<64x32xf32>,
    } else {
    }
    %c0 = arith.constant 0 : index
    %c0_1 = arith.constant 0 : index
    %3 = vector.load %arg6[%c0, %c0_1] : memref<64x32xf32, #tpu.memory_space<vmem>>, vector<64x32xf32>
    %c0_2 = arith.constant 0 : index
    %c0_3 = arith.constant 0 : index
    %4 = vector.load %arg3[%c0_2, %c0_3] : memref<64x32xf32, #tpu.memory_space<vmem>>, vector<64x32xf32>
    %c0_4 = arith.constant 0 : index
    %c0_5 = arith.constant 0 : index
    %5 = vector.load %arg4[%c0_4, %c0_5] : memref<32x32xf32, #tpu.memory_space<vmem>>, vector<32x32xf32>
    %cst = arith.constant dense<0.000000e+00> : vector<64x32xf32>
    %6 = tpu.matmul %4, %5, %cst {dimension_numbers = #tpu.dot_dimension_numbers<[1], [1], [0], [0], [0, 0, 1, 0], [], []>} : vector<64x32xf32>, vector<32x32xf32>, vector<64x32xf32> -> vector<64x32xf32>
    %7 = arith.addf %3, %6 : vector<64x32xf32>
    %c0_6 = arith.constant 0 : index
    %c0_7 = arith.constant 0 : index
    %8 = vector.load %arg6[%c0_6, %c0_7] : memref<64x32xf32, #tpu.memory_space<vmem>>, vector<64x32xf32>
    tpu.vector_store %arg6[%c0_6, %c0_7], %7 {strides = array<i32>} : memref<64x32xf32, #tpu.memory_space<vmem>>, vector<64x32xf32>,
    %c0_i32_8 = arith.constant 0 : i32
    %9 = arith.cmpi eq, %arg2, %c0_i32_8 : i32
    %10 = arith.extui %9 : i1 to i32
    %c0_i32_9 = arith.constant 0 : i32
    %11 = arith.cmpi ne, %10, %c0_i32_9 : i32
    scf.if %11 {
      %c0_10 = arith.constant 0 : index
      %c0_11 = arith.constant 0 : index
      %12 = vector.load %arg6[%c0_10, %c0_11] : memref<64x32xf32, #tpu.memory_space<vmem>>, vector<64x32xf32>
      %c0_12 = arith.constant 0 : index
      %c0_13 = arith.constant 0 : index
      %13 = vector.load %arg5[%c0_12, %c0_13] : memref<64x32xf32, #tpu.memory_space<vmem>>, vector<64x32xf32>
      tpu.vector_store %arg5[%c0_12, %c0_13], %12 {strides = array<i32>} : memref<64x32xf32, #tpu.memory_space<vmem>>, vector<64x32xf32>,
    } else {
    }
    return
  }
  func.func @transform_0(%arg0: i32, %arg1: i32, %arg2: i32) -> (i32, i32) {
    %c0_i32 = arith.constant 0 : i32
    return %arg0, %arg2 : i32, i32
  }
  func.func @transform_1(%arg0: i32, %arg1: i32, %arg2: i32) -> (i32, i32) {
    %c0_i32 = arith.constant 0 : i32
    return %arg1, %arg2 : i32, i32
  }
  func.func @transform_2(%arg0: i32, %arg1: i32, %arg2: i32) -> (i32, i32) {
    %c0_i32 = arith.constant 0 : i32
    return %arg0, %arg1 : i32, i32
  }
}

</mosaic_0001>

<llo_original>
// kernel: tpu_custom_call.1
$region0: #{tpu_custom_call.1}
  #allocation0 [shape = 'u32[]', space=smem, size = 0x4, offset = 0x4, fixed_abs, tag = 'smem constant byte address 0x4 - core index']
  #allocation1 [shape = 'u32[72,128]{1,0:T(1,128)}', space=vmem, size = 0x9000, scoped, tag = 'internal scratch']
  #allocation2 [shape = 'f32[64,32]{1,0:T(8,128)}', space=vmem, size = 0x8000, scoped, tag = 'scratch operand']
  %s0 = inlined_call_operand.vmem [shape: f32[64,32], index: 0, kind: input, shape index: {}]
  %s1 = inlined_call_operand.vmem [shape: f32[32,32], index: 1, kind: input, shape index: {}]
  %s2 = inlined_call_operand.vmem [shape: f32[64,32], index: 2, kind: output, shape index: {}]
  %s3 = sld [smem:[#allocation0]]
  $region26: #{tpu_custom_call.1} parent=0
    _
  %s5 = ssub.s32 1, %s3
  %s6 = scalar_select 0, %s5, %s3
  // Predicated region
  $region2: #{tpu_custom_call.1} parent=0 // pred_check
    _
  $region3: #{tpu_custom_call.1} parent=0 // pred_check_branch
    %8 = sbr.rel (0) target = $region5
  $region4: #{tpu_custom_call.1} parent=0 // pred_region
    _
  $region5: #{tpu_custom_call.1} parent=0 // pred_fallthru
    _
  // Predicated region
  $region6: #{tpu_custom_call.1} parent=0 // pred_check
    _
  $region7: #{tpu_custom_call.1} parent=0 // pred_check_branch
    %10 = sbr.rel (0) target = $region9
  $region8: #{tpu_custom_call.1} parent=0 // pred_region
    _
  $region9: #{tpu_custom_call.1} parent=0 // pred_fallthru
    _
  %p11 = scmp.eq.s32.totalorder 0, 0
  // Predicated region
  $region10: #{tpu_custom_call.1} parent=0 // pred_check
    %p12 = pneg %p11
  $region11: #{tpu_custom_call.1} parent=0 // pred_check_branch
    %14 = sbr.rel (%p12) target = $region13
  $region12: #{tpu_custom_call.1} parent=0 // pred_region
    %vm15 = vcmask 261120
    %16 = vst.msk [vmem:[#allocation2] sm:$0xff] %vm15, 0.0
    %17 = vst.msk [vmem:[#allocation2 + $0x8] sm:$0xff] %vm15, 0.0
    %18 = vst.msk [vmem:[#allocation2 + $0x10] sm:$0xff] %vm15, 0.0
    %19 = vst.msk [vmem:[#allocation2 + $0x18] sm:$0xff] %vm15, 0.0
    %20 = vst.msk [vmem:[#allocation2 + $0x20] sm:$0xff] %vm15, 0.0
    %21 = vst.msk [vmem:[#allocation2 + $0x28] sm:$0xff] %vm15, 0.0
    %22 = vst.msk [vmem:[#allocation2 + $0x30] sm:$0xff] %vm15, 0.0
    %23 = vst.msk [vmem:[#allocation2 + $0x38] sm:$0xff] %vm15, 0.0
  $region13: #{tpu_custom_call.1} parent=0 // pred_fallthru
    _
  %v24 = vld [vmem:[#allocation2] sm:$0xff]
  %v25 = vld [vmem:[#allocation2 + $0x8] sm:$0xff]
  %v26 = vld [vmem:[#allocation2 + $0x10] sm:$0xff]
  %v27 = vld [vmem:[#allocation2 + $0x18] sm:$0xff]
  %v28 = vld [vmem:[#allocation2 + $0x20] sm:$0xff]
  %v29 = vld [vmem:[#allocation2 + $0x28] sm:$0xff]
  %v30 = vld [vmem:[#allocation2 + $0x30] sm:$0xff]
  %v31 = vld [vmem:[#allocation2 + $0x38] sm:$0xff]
  %v32 = vld [vmem:[%s0] sm:$0xff]
  %v33 = vld [vmem:[%s0 + $0x8] sm:$0xff]
  %v34 = vld [vmem:[%s0 + $0x10] sm:$0xff]
  %v35 = vld [vmem:[%s0 + $0x18] sm:$0xff]
  %v36 = vld [vmem:[%s0 + $0x20] sm:$0xff]
  %v37 = vld [vmem:[%s0 + $0x28] sm:$0xff]
  %v38 = vld [vmem:[%s0 + $0x30] sm:$0xff]
  %v39 = vld [vmem:[%s0 + $0x38] sm:$0xff]
  %v40 = vld [vmem:[%s1] sm:$0xff]
  %v41 = vld [vmem:[%s1 + $0x8] sm:$0xff]
  %v42 = vld [vmem:[%s1 + $0x10] sm:$0xff]
  %v43 = vld [vmem:[%s1 + $0x18] sm:$0xff]
  %vm44 = vcmask 261120
  %v46 = vsel %vm44, %v32, 0
  %v49 = vsel %vm44, %v33, 0
  %v52 = vsel %vm44, %v34, 0
  %v55 = vsel %vm44, %v35, 0
  %v58 = vsel %vm44, %v36, 0
  %v61 = vsel %vm44, %v37, 0
  %v64 = vsel %vm44, %v38, 0
  %v67 = vsel %vm44, %v39, 0
  %v70 = vsel %vm44, %v40, 0
  %v73 = vsel %vm44, %v41, 0
  %v76 = vsel %vm44, %v42, 0
  %v79 = vsel %vm44, %v43, 0
  %81 = vmatpush.xpose.msra.mxu0 0.0
  %82 = vmatpush.xpose.msra.mxu0 0.0
  %83 = vmatpush.xpose.msra.mxu0 0.0
  %84 = vmatpush.xpose.msra.mxu0 0.0
  %85 = vmatpush.xpose.msra.mxu0 0.0
  %86 = vmatpush.xpose.msra.mxu0 0.0
  %87 = vmatpush.xpose.msra.mxu0 0.0
  %88 = vmatpush.xpose.msra.mxu0 0.0
  %89 = vmatpush.xpose.msra.mxu0 0.0
  %90 = vmatpush.xpose.msra.mxu0 0.0
  %91 = vmatpush.xpose.msra.mxu0 0.0
  %92 = vmatpush.xpose.msra.mxu0 0.0
  %93 = vmatpush.xpose.msra.mxu0 %v79
  %94 = vmatpush.xpose.msra.mxu0 %v76
  %95 = vmatpush.xpose.msra.mxu0 %v73
  %96 = vmatpush.xpose.msra.mxu0 %v70
  %97 = vmatmul.f32.gmra.mxu0 %v46
  %v98 = vpop.f32.mrf.mxu0
  %v99 = vadd.f32 0.0, %v98
  %100 = vmatmul.f32.gmra.mxu0 %v49
  %v101 = vpop.f32.mrf.mxu0
  %v102 = vadd.f32 0.0, %v101
  %103 = vmatmul.f32.gmra.mxu0 %v52
  %v104 = vpop.f32.mrf.mxu0
  %v105 = vadd.f32 0.0, %v104
  %106 = vmatmul.f32.gmra.mxu0 %v55
  %v107 = vpop.f32.mrf.mxu0
  %v108 = vadd.f32 0.0, %v107
  %109 = vmatmul.f32.gmra.mxu0 %v58
  %v110 = vpop.f32.mrf.mxu0
  %v111 = vadd.f32 0.0, %v110
  %112 = vmatmul.f32.gmra.mxu0 %v61
  %v113 = vpop.f32.mrf.mxu0
  %v114 = vadd.f32 0.0, %v113
  %115 = vmatmul.f32.gmra.mxu0 %v64
  %v116 = vpop.f32.mrf.mxu0
  %v117 = vadd.f32 0.0, %v116
  %118 = vmatmul.f32.gmra.mxu0 %v67
  %v119 = vpop.f32.mrf.mxu0
  %v120 = vadd.f32 0.0, %v119
  %121 = vdwg.mxu0
  %v122 = vadd.f32 %v24, %v99
  %v123 = vadd.f32 %v25, %v102
  %v124 = vadd.f32 %v26, %v105
  %v125 = vadd.f32 %v27, %v108
  %v126 = vadd.f32 %v28, %v111
  %v127 = vadd.f32 %v29, %v114
  %v128 = vadd.f32 %v30, %v117
  %v129 = vadd.f32 %v31, %v120
  %130 = vst.msk [vmem:[#allocation2] sm:$0xff] %vm44, %v122
  %131 = vst.msk [vmem:[#allocation2 + $0x8] sm:$0xff] %vm44, %v123
  %132 = vst.msk [vmem:[#allocation2 + $0x10] sm:$0xff] %vm44, %v124
  %133 = vst.msk [vmem:[#allocation2 + $0x18] sm:$0xff] %vm44, %v125
  %134 = vst.msk [vmem:[#allocation2 + $0x20] sm:$0xff] %vm44, %v126
  %135 = vst.msk [vmem:[#allocation2 + $0x28] sm:$0xff] %vm44, %v127
  %136 = vst.msk [vmem:[#allocation2 + $0x30] sm:$0xff] %vm44, %v128
  %137 = vst.msk [vmem:[#allocation2 + $0x38] sm:$0xff] %vm44, %v129
  // Predicated region
  $region14: #{tpu_custom_call.1} parent=0 // pred_check
    %p138 = pneg %p11
  $region15: #{tpu_custom_call.1} parent=0 // pred_check_branch
    %140 = sbr.rel (%p138) target = $region17
  $region16: #{tpu_custom_call.1} parent=0 // pred_region
    %v141 = vld [vmem:[#allocation2] sm:$0xff]
    %v142 = vld [vmem:[#allocation2 + $0x8] sm:$0xff]
    %v143 = vld [vmem:[#allocation2 + $0x10] sm:$0xff]
    %v144 = vld [vmem:[#allocation2 + $0x18] sm:$0xff]
    %v145 = vld [vmem:[#allocation2 + $0x20] sm:$0xff]
    %v146 = vld [vmem:[#allocation2 + $0x28] sm:$0xff]
    %v147 = vld [vmem:[#allocation2 + $0x30] sm:$0xff]
    %v148 = vld [vmem:[#allocation2 + $0x38] sm:$0xff]
    %149 = vst.msk [vmem:[%s2] sm:$0xff] %vm44, %v141
    %150 = vst.msk [vmem:[%s2 + $0x8] sm:$0xff] %vm44, %v142
    %151 = vst.msk [vmem:[%s2 + $0x10] sm:$0xff] %vm44, %v143
    %152 = vst.msk [vmem:[%s2 + $0x18] sm:$0xff] %vm44, %v144
    %153 = vst.msk [vmem:[%s2 + $0x20] sm:$0xff] %vm44, %v145
    %154 = vst.msk [vmem:[%s2 + $0x28] sm:$0xff] %vm44, %v146
    %155 = vst.msk [vmem:[%s2 + $0x30] sm:$0xff] %vm44, %v147
    %156 = vst.msk [vmem:[%s2 + $0x38] sm:$0xff] %vm44, %v148
  $region17: #{tpu_custom_call.1} parent=0 // pred_fallthru
    _
  // Predicated region
  $region18: #{tpu_custom_call.1} parent=0 // pred_check
    _
  $region19: #{tpu_custom_call.1} parent=0 // pred_check_branch
    %158 = sbr.rel (0) target = $region21
  $region20: #{tpu_custom_call.1} parent=0 // pred_region
    _
  $region21: #{tpu_custom_call.1} parent=0 // pred_fallthru
    _
  // Predicated region
  $region22: #{tpu_custom_call.1} parent=0 // pred_check
    _
  $region23: #{tpu_custom_call.1} parent=0 // pred_check_branch
    %160 = sbr.rel (0) target = $region25
  $region24: #{tpu_custom_call.1} parent=0 // pred_region
    _
  $region25: #{tpu_custom_call.1} parent=0 // pred_fallthru
    _

</llo_original>
